<compile_context>
chip_gen: v6e
topology: v6e:2x2x1
jax: 0.10.0
libtpu: 0.0.40
codegen_flags: <defaults>
</compile_context>

<pallas_src>
import functools
import math

import jax
import jax.numpy as jnp
from jax.experimental import pallas as pl
from jax.experimental.pallas import tpu as pltpu


# ---------------------------------------------------------------------------
# helpers
# ---------------------------------------------------------------------------
def _pick_tile(n, max_tile, multiple):
    """Largest divisor of n that is <= max_tile and a multiple of `multiple`;
    falls back to the full dimension (always a legal block size)."""
    if n <= max_tile:
        return n
    for t in range(max_tile, 0, -1):
        if n % t == 0 and t % multiple == 0:
            return t
    return n


# ---------------------------------------------------------------------------
# Linear (matmul + bias) kernel — used for q / kv / qkv / out projections
# ---------------------------------------------------------------------------
def _linear_kernel(x_ref, w_ref, b_ref, o_ref, acc_ref):
    k = pl.program_id(2)

    @pl.when(k == 0)
    def _init():
        acc_ref[...] = jnp.zeros_like(acc_ref)

    acc_ref[...] += jnp.dot(
        x_ref[...], w_ref[...], preferred_element_type=jnp.float32
    )

    @pl.when(k == pl.num_programs(2) - 1)
    def _finalize():
        o_ref[...] = (acc_ref[...] + b_ref[...].astype(jnp.float32)).astype(o_ref.dtype)


def linear_pallas(x2d, w, b):
    """y = x2d @ w + b  with x2d: (M, K), w: (K, N), b: (N,)."""
    M, K = x2d.shape
    Kw, N = w.shape
    assert K == Kw, (K, Kw)

    tm = _pick_tile(M, 256, 8)
    tk = _pick_tile(K, 512, 128)
    tn = _pick_tile(N, 256, 128)
    grid = (M // tm, N // tn, K // tk)
    b2d = b.reshape(1, N)

    return pl.pallas_call(
        _linear_kernel,
        out_shape=jax.ShapeDtypeStruct((M, N), x2d.dtype),
        grid=grid,
        in_specs=[
            pl.BlockSpec((tm, tk), lambda i, j, k: (i, k)),
            pl.BlockSpec((tk, tn), lambda i, j, k: (k, j)),
            pl.BlockSpec((1, tn), lambda i, j, k: (0, j)),
        ],
        out_specs=pl.BlockSpec((tm, tn), lambda i, j, k: (i, j)),
        scratch_shapes=[pltpu.VMEM((tm, tn), jnp.float32)],
        compiler_params=pltpu.CompilerParams(
            dimension_semantics=("parallel", "parallel", "arbitrary"),
        ),
    )(x2d, w, b2d)


# ---------------------------------------------------------------------------
# Flash-style scaled dot product attention kernel (online softmax)
# ---------------------------------------------------------------------------
def _attn_body(q_ref, k_ref, v_ref, o_ref, m_sc, l_sc, acc_sc, *, scale, mask_ref=None):
    ki = pl.program_id(2)

    @pl.when(ki == 0)
    def _init():
        m_sc[...] = jnp.full(m_sc.shape, -jnp.inf, dtype=m_sc.dtype)
        l_sc[...] = jnp.zeros_like(l_sc)
        acc_sc[...] = jnp.zeros_like(acc_sc)

    q = q_ref[0]                                   # (tq, D)
    k = k_ref[0]                                   # (tk, D)
    s = jnp.dot(q, k.T, preferred_element_type=jnp.float32) * scale   # (tq, tk)
    if mask_ref is not None:
        s = s + mask_ref[0].astype(jnp.float32)

    m_prev = m_sc[...]                             # (tq, 1)
    m_new = jnp.maximum(m_prev, s.max(axis=-1, keepdims=True))
    alpha = jnp.exp(m_prev - m_new)
    p = jnp.exp(s - m_new)
    l_sc[...] = alpha * l_sc[...] + p.sum(axis=-1, keepdims=True)
    acc_sc[...] = alpha * acc_sc[...] + jnp.dot(
        p.astype(v_ref.dtype), v_ref[0], preferred_element_type=jnp.float32
    )
    m_sc[...] = m_new

    @pl.when(ki == pl.num_programs(2) - 1)
    def _finalize():
        o_ref[0] = (acc_sc[...] / l_sc[...]).astype(o_ref.dtype)


def _attn_kernel(q_ref, k_ref, v_ref, o_ref, m_sc, l_sc, acc_sc, *, scale):
    _attn_body(q_ref, k_ref, v_ref, o_ref, m_sc, l_sc, acc_sc, scale=scale)


def _attn_kernel_masked(mask_ref, q_ref, k_ref, v_ref, o_ref, m_sc, l_sc, acc_sc, *, scale):
    _attn_body(q_ref, k_ref, v_ref, o_ref, m_sc, l_sc, acc_sc, scale=scale,
               mask_ref=mask_ref)


def sdpa_pallas(q, k, v, attn_mask=None, *, num_heads):
    """q: (B*H, Nq, D), k/v: (B*H, Nkv, D); attn_mask: additive (B, Nq, Nkv) or None."""
    BH, Nq, D = q.shape
    _, Nkv, _ = k.shape
    scale = 1.0 / math.sqrt(D)

    # kv tile is the mask's lane dim when a mask is present -> keep it 128-dense then.
    lane_mult = 128 if attn_mask is not None else 8
    tq = _pick_tile(Nq, 256, 8)
    tk = _pick_tile(Nkv, 256, lane_mult)
    grid = (BH, Nq // tq, Nkv // tk)

    q_spec = pl.BlockSpec((1, tq, D), lambda bh, qi, ki: (bh, qi, 0))
    k_spec = pl.BlockSpec((1, tk, D), lambda bh, qi, ki: (bh, ki, 0))
    v_spec = pl.BlockSpec((1, tk, D), lambda bh, qi, ki: (bh, ki, 0))
    o_spec = pl.BlockSpec((1, tq, D), lambda bh, qi, ki: (bh, qi, 0))

    scratch = [
        pltpu.VMEM((tq, 1), jnp.float32),   # running max
        pltpu.VMEM((tq, 1), jnp.float32),   # running denom
        pltpu.VMEM((tq, D), jnp.float32),   # running weighted sum
    ]
    cparams = pltpu.CompilerParams(
        dimension_semantics=("parallel", "parallel", "arbitrary"),
    )
    out_shape = jax.ShapeDtypeStruct((BH, Nq, D), q.dtype)

    if attn_mask is None:
        kernel = functools.partial(_attn_kernel, scale=scale)
        return pl.pallas_call(
            kernel, out_shape=out_shape, grid=grid,
            in_specs=[q_spec, k_spec, v_spec], out_specs=o_spec,
            scratch_shapes=scratch, compiler_params=cparams,
        )(q, k, v)

    H = num_heads
    mask_spec = pl.BlockSpec((1, tq, tk), lambda bh, qi, ki: (bh // H, qi, ki))
    kernel = functools.partial(_attn_kernel_masked, scale=scale)
    return pl.pallas_call(
        kernel, out_shape=out_shape, grid=grid,
        in_specs=[mask_spec, q_spec, k_spec, v_spec], out_specs=o_spec,
        scratch_shapes=scratch, compiler_params=cparams,
    )(attn_mask, q, k, v)


# ---------------------------------------------------------------------------
# CrossAttentionOp forward (Pallas) + parameter init + pure-JAX reference
# ---------------------------------------------------------------------------
def init_cross_attention_params(key, attention_dim, num_heads, dim_q, dim_kv,
                                use_biases=True, is_sa=False, dtype=jnp.float32):
    del num_heads
    ks = jax.random.split(key, 6)

    def dense_w(k, fan_in, fan_out):
        return (jax.random.normal(k, (fan_in, fan_out), dtype)
                * jnp.asarray(1.0 / math.sqrt(fan_in), dtype))

    def dense_b(k, fan_out):
        if use_biases:
            return jax.random.normal(k, (fan_out,), dtype) * jnp.asarray(0.02, dtype)
        return jnp.zeros((fan_out,), dtype)

    params = {}
    if is_sa:
        params["qkv_w"] = dense_w(ks[0], dim_q, 3 * attention_dim)
        params["qkv_b"] = dense_b(ks[1], 3 * attention_dim)
    else:
        params["q_w"] = dense_w(ks[0], dim_q, attention_dim)
        params["q_b"] = dense_b(ks[1], attention_dim)
        params["kv_w"] = dense_w(ks[2], dim_kv, 2 * attention_dim)
        params["kv_b"] = dense_b(ks[3], 2 * attention_dim)
    params["out_w"] = dense_w(ks[4], attention_dim, dim_q)
    params["out_b"] = dense_b(ks[5], dim_q)
    return params


def cross_attention_forward(params, x_to, x_from=None, attention_mask=None, *,
                            num_heads, is_sa):
    """Pallas forward. attention_mask (if given) is an additive float mask (B, Nq, Nkv).
    # TODO(synk): boolean masks must be converted to additive (-inf) masks by the caller.
    """
    if x_from is None:
        x_from = x_to
    B, Nq, dim_q = x_to.shape
    _, Nkv, dim_kv = x_from.shape

    if is_sa:
        A3 = params["qkv_w"].shape[1]
        A = A3 // 3
        qkv = linear_pallas(x_to.reshape(B * Nq, dim_q),
                            params["qkv_w"], params["qkv_b"]).reshape(B, Nq, A3)
        q, k, v = qkv[..., :A], qkv[..., A:2 * A], qkv[..., 2 * A:]
    else:
        A = params["q_w"].shape[1]
        q = linear_pallas(x_to.reshape(B * Nq, dim_q),
                          params["q_w"], params["q_b"]).reshape(B, Nq, A)
        kv = linear_pallas(x_from.reshape(B * Nkv, dim_kv),
                           params["kv_w"], params["kv_b"]).reshape(B, Nkv, 2 * A)
        k, v = kv[..., :A], kv[..., A:]

    H = num_heads
    Dh = A // H

    def split_heads(t, n):   # 'b n (h d) -> (b h) n d'
        return t.reshape(B, n, H, Dh).transpose(0, 2, 1, 3).reshape(B * H, n, Dh)

    qh = split_heads(q, Nq)
    kh = split_heads(k, Nkv)
    vh = split_heads(v, Nkv)

    oh = sdpa_pallas(qh, kh, vh, attn_mask=attention_mask, num_heads=H)

    # '(b h) n d -> b n (h d)'
    o = oh.reshape(B, H, Nq, Dh).transpose(0, 2, 1, 3).reshape(B * Nq, A)
    out = linear_pallas(o, params["out_w"], params["out_b"]).reshape(B, Nq, dim_q)
    return out


def cross_attention_reference(params, x_to, x_from=None, attention_mask=None, *,
                              num_heads, is_sa):
    if x_from is None:
        x_from = x_to
    B, Nq, _ = x_to.shape
    _, Nkv, _ = x_from.shape
    if is_sa:
        A = params["qkv_w"].shape[1] // 3
        qkv = x_to @ params["qkv_w"] + params["qkv_b"]
        q, k, v = jnp.split(qkv, 3, axis=-1)
    else:
        A = params["q_w"].shape[1]
        q = x_to @ params["q_w"] + params["q_b"]
        kv = x_from @ params["kv_w"] + params["kv_b"]
        k, v = jnp.split(kv, 2, axis=-1)
    H = num_heads
    Dh = A // H
    q = q.reshape(B, Nq, H, Dh).transpose(0, 2, 1, 3)
    k = k.reshape(B, Nkv, H, Dh).transpose(0, 2, 1, 3)
    v = v.reshape(B, Nkv, H, Dh).transpose(0, 2, 1, 3)
    s = jnp.einsum("bhqd,bhkd->bhqk", q, k) / math.sqrt(Dh)
    if attention_mask is not None:
        s = s + attention_mask[:, None, :, :]
    p = jax.nn.softmax(s, axis=-1)
    o = jnp.einsum("bhqk,bhkd->bhqd", p, v)
    o = o.transpose(0, 2, 1, 3).reshape(B, Nq, A)
    return o @ params["out_w"] + params["out_b"]


if __name__ == "__main__":
    key = jax.random.PRNGKey(0)
    B, Nq, Nkv = 2, 8, 16
    dim_q, dim_kv, attention_dim, num_heads = 32, 24, 32, 4

    k_x, k_y, k_p1, k_p2, k_m = jax.random.split(key, 5)
    x_to = jax.random.normal(k_x, (B, Nq, dim_q), jnp.float32)
    x_from = jax.random.normal(k_y, (B, Nkv, dim_kv), jnp.float32)

    # --- cross-attention path (is_sa=False) with an additive attention mask ---
    params_ca = init_cross_attention_params(
        k_p1, attention_dim, num_heads, dim_q, dim_kv, use_biases=True, is_sa=False)
    attn_mask = jnp.where(
        jax.random.bernoulli(k_m, 0.8, (B, Nq, Nkv)), 0.0, -1e9
    ).astype(jnp.float32)

    out_ca = jax.block_until_ready(
        cross_attention_forward(params_ca, x_to, x_from, attention_mask=attn_mask,
                                num_heads=num_heads, is_sa=False))
    ref_ca = cross_attention_reference(params_ca, x_to, x_from,
                                       attention_mask=attn_mask,
                                       num_heads=num_heads, is_sa=False)
    assert out_ca.shape == (B, Nq, dim_q)
    err_ca = float(jnp.max(jnp.abs(out_ca - ref_ca)))
    assert err_ca < 1e-2, f"cross-attention mismatch, max abs err={err_ca}"

    # --- self-attention path (is_sa=True), no mask ---
    params_sa = init_cross_attention_params(
        k_p2, attention_dim, num_heads, dim_q, dim_q, use_biases=True, is_sa=True)
    out_sa = jax.block_until_ready(
        cross_attention_forward(params_sa, x_to, None,
                                num_heads=num_heads, is_sa=True))
    ref_sa = cross_attention_reference(params_sa, x_to, None,
                                       num_heads=num_heads, is_sa=True)
    err_sa = float(jnp.max(jnp.abs(out_sa - ref_sa)))
    assert err_sa < 1e-2, f"self-attention mismatch, max abs err={err_sa}"

    print("KERNEL_OK")
</pallas_src>

<mosaic_0001>
module attributes {stable_mosaic.version = 11 : i64} {
  func.func @_linear_kernel(%arg0: i32, %arg1: i32, %arg2: i32, %arg3: memref<16x32xf32, #tpu.memory_space<vmem>>, %arg4: memref<32x32xf32, #tpu.memory_space<vmem>>, %arg5: memref<1x32xf32, #tpu.memory_space<vmem>>, %arg6: memref<16x32xf32, #tpu.memory_space<vmem>>, %arg7: memref<16x32xf32, #tpu.memory_space<vmem>>) attributes {dimension_semantics = [#tpu.dimension_semantics<parallel>, #tpu.dimension_semantics<parallel>, #tpu.dimension_semantics<arbitrary>], iteration_bounds = array<i64: 1, 1, 1>, scalar_prefetch = 0 : i64, scratch_operands = 1 : i64, tpu.core_type = #tpu.core_type<tc>, window_params = [{transform_indices = @transform_0, window_bounds = array<i64: 16, 32>}, {transform_indices = @transform_1, window_bounds = array<i64: 32, 32>}, {transform_indices = @transform_2, window_bounds = array<i64: 1, 32>}, {transform_indices = @transform_3, window_bounds = array<i64: 16, 32>}]} {
    %c0_i32 = arith.constant 0 : i32
    %0 = arith.cmpi eq, %arg2, %c0_i32 : i32
    %1 = arith.extui %0 : i1 to i32
    %c0_i32_0 = arith.constant 0 : i32
    %2 = arith.cmpi ne, %1, %c0_i32_0 : i32
    scf.if %2 {
      %cst_10 = arith.constant 0.000000e+00 : f32
      %12 = vector.broadcast %cst_10 : f32 to vector<16x32xf32>
      %c0_11 = arith.constant 0 : index
      %c0_12 = arith.constant 0 : index
      %13 = vector.load %arg7[%c0_11, %c0_12] : memref<16x32xf32, #tpu.memory_space<vmem>>, vector<16x32xf32>
      tpu.vector_store %arg7[%c0_11, %c0_12], %12 {strides = array<i32>} : memref<16x32xf32, #tpu.memory_space<vmem>>, vector<16x32xf32>,
    } else {
    }
    %c0 = arith.constant 0 : index
    %c0_1 = arith.constant 0 : index
    %3 = vector.load %arg7[%c0, %c0_1] : memref<16x32xf32, #tpu.memory_space<vmem>>, vector<16x32xf32>
    %c0_2 = arith.constant 0 : index
    %c0_3 = arith.constant 0 : index
    %4 = vector.load %arg3[%c0_2, %c0_3] : memref<16x32xf32, #tpu.memory_space<vmem>>, vector<16x32xf32>
    %c0_4 = arith.constant 0 : index
    %c0_5 = arith.constant 0 : index
    %5 = vector.load %arg4[%c0_4, %c0_5] : memref<32x32xf32, #tpu.memory_space<vmem>>, vector<32x32xf32>
    %cst = arith.constant dense<0.000000e+00> : vector<16x32xf32>
    %6 = tpu.matmul %4, %5, %cst {dimension_numbers = #tpu.dot_dimension_numbers<[1], [0], [0], [1], [0, 0, 1, 1], [], []>} : vector<16x32xf32>, vector<32x32xf32>, vector<16x32xf32> -> vector<16x32xf32>
    %7 = arith.addf %3, %6 : vector<16x32xf32>
    %c0_6 = arith.constant 0 : index
    %c0_7 = arith.constant 0 : index
    %8 = vector.load %arg7[%c0_6, %c0_7] : memref<16x32xf32, #tpu.memory_space<vmem>>, vector<16x32xf32>
    tpu.vector_store %arg7[%c0_6, %c0_7], %7 {strides = array<i32>} : memref<16x32xf32, #tpu.memory_space<vmem>>, vector<16x32xf32>,
    %c0_i32_8 = arith.constant 0 : i32
    %9 = arith.cmpi eq, %arg2, %c0_i32_8 : i32
    %10 = arith.extui %9 : i1 to i32
    %c0_i32_9 = arith.constant 0 : i32
    %11 = arith.cmpi ne, %10, %c0_i32_9 : i32
    scf.if %11 {
      %c0_10 = arith.constant 0 : index
      %c0_11 = arith.constant 0 : index
      %12 = vector.load %arg7[%c0_10, %c0_11] : memref<16x32xf32, #tpu.memory_space<vmem>>, vector<16x32xf32>
      %c0_12 = arith.constant 0 : index
      %c0_13 = arith.constant 0 : index
      %13 = vector.load %arg5[%c0_12, %c0_13] : memref<1x32xf32, #tpu.memory_space<vmem>>, vector<1x32xf32>
      %14 = vector.broadcast %13 : vector<1x32xf32> to vector<16x32xf32>
      %15 = arith.addf %12, %14 : vector<16x32xf32>
      %c0_14 = arith.constant 0 : index
      %c0_15 = arith.constant 0 : index
      %16 = vector.load %arg6[%c0_14, %c0_15] : memref<16x32xf32, #tpu.memory_space<vmem>>, vector<16x32xf32>
      tpu.vector_store %arg6[%c0_14, %c0_15], %15 {strides = array<i32>} : memref<16x32xf32, #tpu.memory_space<vmem>>, vector<16x32xf32>,
    } else {
    }
    return
  }
  func.func @transform_0(%arg0: i32, %arg1: i32, %arg2: i32) -> (i32, i32) {
    %c0_i32 = arith.constant 0 : i32
    return %arg0, %arg2 : i32, i32
  }
  func.func @transform_1(%arg0: i32, %arg1: i32, %arg2: i32) -> (i32, i32) {
    %c0_i32 = arith.constant 0 : i32
    return %arg2, %arg1 : i32, i32
  }
  func.func @transform_2(%arg0: i32, %arg1: i32, %arg2: i32) -> (i32, i32) {
    %c0_i32 = arith.constant 0 : i32
    %c0_i32_0 = arith.constant 0 : i32
    return %c0_i32, %arg1 : i32, i32
  }
  func.func @transform_3(%arg0: i32, %arg1: i32, %arg2: i32) -> (i32, i32) {
    %c0_i32 = arith.constant 0 : i32
    return %arg0, %arg1 : i32, i32
  }
}

</mosaic_0001>

<llo_original>
// kernel: tpu_custom_call.1
$region0: #{tpu_custom_call.1}
  #allocation0 [shape = 'u32[]', space=smem, size = 0x4, offset = 0x4, fixed_abs, tag = 'smem constant byte address 0x4 - core index']
  #allocation1 [shape = 'u32[144,128]{1,0:T(1,128)}', space=vmem, size = 0x12000, scoped, tag = 'internal scratch']
  #allocation2 [shape = 'f32[16,32]{1,0:T(8,128)}', space=vmem, size = 0x2000, scoped, tag = 'scratch operand']
  %s0 = inlined_call_operand.hbm [shape: f32[16,32], index: 0, kind: input, shape index: {}]
  %s1 = inlined_call_operand.hbm [shape: f32[32,32], index: 1, kind: input, shape index: {}]
  %s2 = inlined_call_operand.vmem [shape: f32[1,32], index: 2, kind: input, shape index: {}]
  %s3 = inlined_call_operand.hbm [shape: f32[16,32], index: 3, kind: output, shape index: {}]
  %s4 = sld [smem:[#allocation0]]
  $region38: #{tpu_custom_call.1} parent=0
    _
  %s6 = ssub.s32 1, %s4
  %s7 = scalar_select 0, %s6, %s4
  $region1: #{tpu_custom_call.1} parent=0
    #allocation3 [shape = 'u8[8192]{0}', space=vmem, size = 0x2000, scoped, tag = 'input window, operand 0, single buffered']
    #allocation4 [shape = 's32[1]{0}', space=sflag, size = 0x4, scoped, tag = 'scoped memory for tpu_custom_call.1']
    #allocation5 [shape = 's32[1]{0}', space=sflag, size = 0x4, scoped, tag = 'scoped memory for tpu_custom_call.1']
    #allocation6 [shape = 'u8[16384]{0}', space=vmem, size = 0x4000, scoped, tag = 'input window, operand 1, single buffered']
    #allocation7 [shape = 's32[1]{0}', space=sflag, size = 0x4, scoped, tag = 'scoped memory for tpu_custom_call.1']
    #allocation8 [shape = 'u8[8192]{0}', space=vmem, size = 0x2000, scoped, tag = 'output window, operand 0, single buffered']
    %8 = vsyncpa [#allocation4], 0
    %9 = vsyncpa [#allocation7], 0
    %10 = vsyncpa [#allocation5], 0
    // Predicated region
    $region2: #{tpu_custom_call.1} parent=1 // pred_check
      _
    $region3: #{tpu_custom_call.1} parent=1 // pred_check_branch
      %12 = sbr.rel (0) target = $region5
    $region4: #{tpu_custom_call.1} parent=1 // pred_region
      %s14 = ssub.s32 256, 256
      %15 = vsyncadd [#allocation4], %s14
      %s16 = sshll.u32 [#allocation3], 4
      %s17 = int_to_ptr.vmem [resolvable:$true] %s16
      %22 = dma.hbm_to_vmem [thread:$0]  %s0, 256, %s17, [#allocation4], 128, 128, 8
    $region5: #{tpu_custom_call.1} parent=1 // pred_fallthru
      _
    // Predicated region
    $region6: #{tpu_custom_call.1} parent=1 // pred_check
      _
    $region7: #{tpu_custom_call.1} parent=1 // pred_check_branch
      %24 = sbr.rel (0) target = $region9
    $region8: #{tpu_custom_call.1} parent=1 // pred_region
      %s26 = ssub.s32 512, 512
      %27 = vsyncadd [#allocation7], %s26
      %s28 = sshll.u32 [#allocation6], 4
      %s29 = int_to_ptr.vmem [resolvable:$true] %s28
      %34 = dma.hbm_to_vmem [thread:$0]  %s1, 512, %s29, [#allocation7], 128, 128, 8
    $region9: #{tpu_custom_call.1} parent=1 // pred_fallthru
      _
    // Predicated region
    $region10: #{tpu_custom_call.1} parent=1 // pred_check
      _
    $region11: #{tpu_custom_call.1} parent=1 // pred_check_branch
      %36 = sbr.rel (0) target = $region13
    $region12: #{tpu_custom_call.1} parent=1 // pred_region
      _
    $region13: #{tpu_custom_call.1} parent=1 // pred_fallthru
      _
    // Predicated region
    $region14: #{tpu_custom_call.1} parent=1 // pred_check
      _
    $region15: #{tpu_custom_call.1} parent=1 // pred_check_branch
      %38 = sbr.rel (0) target = $region17
    $region16: #{tpu_custom_call.1} parent=1 // pred_region
      %39 = dma.done [#allocation4], 256
    $region17: #{tpu_custom_call.1} parent=1 // pred_fallthru
      _
    // Predicated region
    $region18: #{tpu_custom_call.1} parent=1 // pred_check
      _
    $region19: #{tpu_custom_call.1} parent=1 // pred_check_branch
      %41 = sbr.rel (0) target = $region21
    $region20: #{tpu_custom_call.1} parent=1 // pred_region
      %42 = dma.done [#allocation7], 512
    $region21: #{tpu_custom_call.1} parent=1 // pred_fallthru
      _
    %p43 = scmp.eq.s32.totalorder 0, 0
    // Predicated region
    $region22: #{tpu_custom_call.1} parent=1 // pred_check
      %p44 = pneg %p43
    $region23: #{tpu_custom_call.1} parent=1 // pred_check_branch
      %46 = sbr.rel (%p44) target = $region25
    $region24: #{tpu_custom_call.1} parent=1 // pred_region
      %vm47 = vcmask 261120
      %48 = vst.msk [vmem:[#allocation2] sm:$0xff] %vm47, 0.0
      %49 = vst.msk [vmem:[#allocation2 + $0x8] sm:$0xff] %vm47, 0.0
    $region25: #{tpu_custom_call.1} parent=1 // pred_fallthru
      _
    %v50 = vld [vmem:[#allocation2] sm:$0xff]
    %v51 = vld [vmem:[#allocation2 + $0x8] sm:$0xff]
    %v52 = vld [vmem:[#allocation3] sm:$0xff]
    %v53 = vld [vmem:[#allocation3 + $0x8] sm:$0xff]
    %v54 = vld [vmem:[#allocation6] sm:$0xff]
    %v55 = vld [vmem:[#allocation6 + $0x8] sm:$0xff]
    %v56 = vld [vmem:[#allocation6 + $0x10] sm:$0xff]
    %v57 = vld [vmem:[#allocation6 + $0x18] sm:$0xff]
    %vm58 = vcmask 261120
    %v60 = vsel %vm58, %v52, 0
    %v63 = vsel %vm58, %v53, 0
    %65 = vmatprep.subr.mxu0 0.0
    %66 = vmatpush1.msra.mxu0 0.0
    %67 = vmatprep.subr.mxu0 0.0
    %68 = vmatpush1.msra.mxu0 0.0
    %69 = vmatprep.subr.mxu0 0.0
    %70 = vmatpush1.msra.mxu0 0.0
    %71 = vmatprep.subr.mxu0 0.0
    %72 = vmatpush1.msra.mxu0 0.0
    %73 = vmatprep.subr.mxu0 0.0
    %74 = vmatpush1.msra.mxu0 0.0
    %75 = vmatprep.subr.mxu0 0.0
    %76 = vmatpush1.msra.mxu0 0.0
    %77 = vmatprep.subr.mxu0 0.0
    %78 = vmatpush1.msra.mxu0 0.0
    %79 = vmatprep.subr.mxu0 0.0
    %80 = vmatpush1.msra.mxu0 0.0
    %81 = vmatprep.subr.mxu0 0.0
    %82 = vmatpush1.msra.mxu0 0.0
    %83 = vmatprep.subr.mxu0 0.0
    %84 = vmatpush1.msra.mxu0 0.0
    %85 = vmatprep.subr.mxu0 0.0
    %86 = vmatpush1.msra.mxu0 0.0
    %87 = vmatprep.subr.mxu0 0.0
    %88 = vmatpush1.msra.mxu0 0.0
    %89 = vmatprep.subr.mxu0 0.0
    %90 = vmatpush1.msra.mxu0 %v57
    %91 = vmatprep.subr.mxu0 0.0
    %92 = vmatpush1.msra.mxu0 %v56
    %93 = vmatprep.subr.mxu0 0.0
    %94 = vmatpush1.msra.mxu0 %v55
    %95 = vmatprep.subr.mxu0 0.0
    %96 = vmatpush1.msra.mxu0 %v54
    %97 = vmatprep.subr.mxu0 0.0
    %98 = vmatpush2.msra.mxu0 0.0
    %99 = vmatprep.subr.mxu0 0.0
    %100 = vmatpush2.msra.mxu0 0.0
    %101 = vmatprep.subr.mxu0 0.0
    %102 = vmatpush2.msra.mxu0 0.0
    %103 = vmatprep.subr.mxu0 0.0
    %104 = vmatpush2.msra.mxu0 0.0
    %105 = vmatprep.subr.mxu0 0.0
    %106 = vmatpush2.msra.mxu0 0.0
    %107 = vmatprep.subr.mxu0 0.0
    %108 = vmatpush2.msra.mxu0 0.0
    %109 = vmatprep.subr.mxu0 0.0
    %110 = vmatpush2.msra.mxu0 0.0
    %111 = vmatprep.subr.mxu0 0.0
    %112 = vmatpush2.msra.mxu0 0.0
    %113 = vmatprep.subr.mxu0 0.0
    %114 = vmatpush2.msra.mxu0 0.0
    %115 = vmatprep.subr.mxu0 0.0
    %116 = vmatpush2.msra.mxu0 0.0
    %117 = vmatprep.subr.mxu0 0.0
    %118 = vmatpush2.msra.mxu0 0.0
    %119 = vmatprep.subr.mxu0 0.0
    %120 = vmatpush2.msra.mxu0 0.0
    %121 = vmatprep.subr.mxu0 0.0
    %122 = vmatpush2.msra.mxu0 0.0
    %123 = vmatprep.subr.mxu0 0.0
    %124 = vmatpush2.msra.mxu0 0.0
    %125 = vmatprep.subr.mxu0 0.0
    %126 = vmatpush2.msra.mxu0 0.0
    %127 = vmatprep.subr.mxu0 0.0
    %128 = vmatpush2.msra.mxu0 0.0
    %129 = vmatprep.mubr.f32.mxu0 0.0
    %130 = vmatmul.mubr.f32.gmra.mxu0 %v60
    %v131 = vpop.f32.mrf.mxu0
    %v132 = vadd.f32 0.0, %v131
    %v133 = vpop.f32.mrf.mxu0
    %134 = vmatprep.mubr.f32.mxu0 0.0
    %135 = vmatmul.mubr.f32.gmra.mxu0 %v63
    %v136 = vpop.f32.mrf.mxu0
    %v137 = vadd.f32 0.0, %v136
    %v138 = vpop.f32.mrf.mxu0
    %139 = vdwg.mxu0
    %v140 = vadd.f32 %v50, %v132
    %v141 = vadd.f32 %v51, %v137
    %142 = vst.msk [vmem:[#allocation2] sm:$0xff] %vm58, %v140
    %143 = vst.msk [vmem:[#allocation2 + $0x8] sm:$0xff] %vm58, %v141
    // Predicated region
    $region26: #{tpu_custom_call.1} parent=1 // pred_check
      %p144 = pneg %p43
    $region27: #{tpu_custom_call.1} parent=1 // pred_check_branch
      %146 = sbr.rel (%p144) target = $region29
    $region28: #{tpu_custom_call.1} parent=1 // pred_region
      %v147 = vld [vmem:[#allocation2] sm:$0xff]
      %v148 = vld [vmem:[#allocation2 + $0x8] sm:$0xff]
      %v149 = vld [vmem:[%s2] sm:$0x1]
      %v151 = vlaneseq
      %v152 = vshrl.u32 %v151, 7
      %v153 = vsub.s32 0, %v152
      %v154 = vrot.slane %v149, %v153
      %v156 = vadd.f32 %v147, %v154
      %v157 = vadd.f32 %v148, %v154
      %158 = vst.msk [vmem:[#allocation8] sm:$0xff] %vm58, %v156
      %159 = vst.msk [vmem:[#allocation8 + $0x8] sm:$0xff] %vm58, %v157
    $region29: #{tpu_custom_call.1} parent=1 // pred_fallthru
      _
    // Predicated region
    $region30: #{tpu_custom_call.1} parent=1 // pred_check
      _
    $region31: #{tpu_custom_call.1} parent=1 // pred_check_branch
      %161 = sbr.rel (0) target = $region33
    $region32: #{tpu_custom_call.1} parent=1 // pred_region
      %s163 = ssub.s32 256, 256
      %164 = vsyncadd [#allocation5], %s163
      %s165 = sshll.u32 [#allocation8], 4
      %s166 = int_to_ptr.vmem [resolvable:$true] %s165
      %171 = dma.vmem_to_hbm [thread:$0]  %s166, 256, %s3, [#allocation5], 128, 128, 8
    $region33: #{tpu_custom_call.1} parent=1 // pred_fallthru
      _
    // Predicated region
    $region34: #{tpu_custom_call.1} parent=1 // pred_check
      _
    $region35: #{tpu_custom_call.1} parent=1 // pred_check_branch
      %173 = sbr.rel (0) target = $region37
    $region36: #{tpu_custom_call.1} parent=1 // pred_region
      %174 = dma.done [#allocation5], 256
    $region37: #{tpu_custom_call.1} parent=1 // pred_fallthru
      _
    %175 = vsyncpa [#allocation4], 1
    %176 = vsyncpa [#allocation7], 1
    %177 = vsyncpa [#allocation5], 1

</llo_original>
